<compile_context>
chip_gen: v7x
topology: tpu7x:2x2x1
jax: 0.10.0
libtpu: 0.0.40
codegen_flags: <defaults>
</compile_context>

<pallas_src>
import functools

import jax
import jax.numpy as jnp
from jax.experimental import pallas as pl
from jax.experimental.pallas import tpu as pltpu

_LANES = 128


def _mape_partial_kernel(pred_ref, true_ref, out_ref, *,
                         block_rows, blocks_per_core, last_block,
                         last_block_valid_rows):
    """Accumulate per-(sublane, lane) partial sums of |(t - p) / (t + 1e-8)|.

    Grid = (num_partials, blocks_per_core):
      axis 0 ("parallel")  : independent partials, one (1, 8, 128) output block each
      axis 1 ("arbitrary") : streaming reduction over row-blocks
    """
    p = pl.program_id(0)
    t = pl.program_id(1)

    @pl.when(t == 0)
    def _():
        out_ref[...] = jnp.zeros_like(out_ref)

    logical_block = p * blocks_per_core + t

    def _rel():
        pr = pred_ref[...].astype(jnp.float32)
        tr = true_ref[...].astype(jnp.float32)
        inv = pl.reciprocal(tr + jnp.float32(1e-8), approx=False)  # exact EUP path
        return jnp.abs((tr - pr) * inv)

    def _accumulate(rel):
        # Sublane-preserving reduction: pure vreg adds, no cross-lane XLU work.
        part = jnp.sum(rel.reshape(block_rows // 8, 8, _LANES), axis=0)
        out_ref[...] += part[None, :, :]

    if last_block_valid_rows == block_rows:
        # Every logical block is full: no element masking anywhere.  Only skip
        # clamped / duplicated blocks past the end of this partial's work list.
        @pl.when(logical_block <= last_block)
        def _():
            _accumulate(_rel())
    else:
        @pl.when(logical_block < last_block)
        def _():
            _accumulate(_rel())

        @pl.when(logical_block == last_block)
        def _():
            # Only the final (partial) block pays for a row mask; masked-out rows
            # may hold garbage from the partial DMA, so select 0 before reducing.
            row = jax.lax.broadcasted_iota(jnp.int32, (block_rows, _LANES), 0)
            rel = jnp.where(row < last_block_valid_rows, _rel(), jnp.float32(0.0))
            _accumulate(rel)


def mape_loss(y_pred, y_true, *, block_rows=8192, num_partials=2):
    """Pallas TPU implementation of MAPELoss.forward.

    Returns a float32 scalar equal to
    mean(abs((y_true - y_pred) / (y_true + 1e-8))) * 100.
    """
    assert y_pred.shape == y_true.shape, "y_pred / y_true shape mismatch"
    total_n = int(y_pred.size)
    if total_n == 0:
        # torch.mean over an empty tensor is NaN.
        return jnp.float32(float("nan"))

    # Flatten in C order (matches torch elementwise/mean semantics); keep the
    # native dtypes, the f32 upcast happens per-tile in VMEM inside the kernel.
    p_flat = jnp.ravel(y_pred)
    t_flat = jnp.ravel(y_true)

    rows = total_n // _LANES

    # Native-dtype streaming => prefer a sublane tile that is a multiple of the
    # dtype packing (8 for 32-bit, 16 for 16-bit, 32 for 8-bit elements).
    itemsize = min(jnp.dtype(y_pred.dtype).itemsize,
                   jnp.dtype(y_true.dtype).itemsize)
    sub_mult = 8 * max(1, 4 // max(1, int(itemsize)))

    # Rows handled by the kernel: hard requirement is a multiple of 8 and no
    # larger than the body (so there is at most one partial, masked block).
    if rows >= sub_mult:
        unit = sub_mult
    elif rows >= 8:
        unit = 8
    else:
        unit = 0   # tiny body -> plain JAX (< 1024 elements)

    kernel_n = 0
    body_sum = jnp.float32(0.0)
    if unit:
        bk = max(unit, (int(block_rows) // unit) * unit)
        bk = min(bk, (rows // unit) * unit)
        block_rows = bk

        kernel_n = rows * _LANES
        p2 = p_flat[:kernel_n].reshape(rows, _LANES)
        t2 = t_flat[:kernel_n].reshape(rows, _LANES)

        n_blocks = pl.cdiv(rows, block_rows)
        num_partials = max(1, min(int(num_partials), n_blocks))
        blocks_per_core = pl.cdiv(n_blocks, num_partials)
        last_block = n_blocks - 1
        last_block_valid_rows = rows - last_block * block_rows

        def in_index_map(p, t):
            # Clamp so every (p, t) maps to a valid block; blocks past the end of
            # this partial's work list are skipped by a scalar pl.when in-kernel.
            return (jnp.minimum(p * blocks_per_core + t, last_block), 0)

        kernel = functools.partial(
            _mape_partial_kernel,
            block_rows=block_rows,
            blocks_per_core=blocks_per_core,
            last_block=last_block,
            last_block_valid_rows=last_block_valid_rows,
        )

        partials = pl.pallas_call(
            kernel,
            out_shape=jax.ShapeDtypeStruct((num_partials, 8, _LANES),
                                           jnp.float32),
            grid_spec=pltpu.PrefetchScalarGridSpec(
                num_scalar_prefetch=0,
                grid=(num_partials, blocks_per_core),
                in_specs=[
                    pl.BlockSpec((block_rows, _LANES), in_index_map),
                    pl.BlockSpec((block_rows, _LANES), in_index_map),
                ],
                out_specs=pl.BlockSpec((1, 8, _LANES), lambda p, t: (p, 0, 0)),
            ),
            compiler_params=pltpu.CompilerParams(
                # Outer axis shards the streaming reduction across TensorCores
                # on megacore parts (v7x); inner axis is the reduction.
                dimension_semantics=("parallel", "arbitrary"),
                # 2 inputs x 2 pipeline buffers x <=4 MiB (8192x128 f32) tiles
                # plus f32 temporaries: fits with headroom even in v7x's 64 MiB.
                vmem_limit_bytes=48 * 1024 * 1024,
            ),
        )(p2, t2)

        body_sum = jnp.sum(partials)

    # Remainder (lane tail + any sub-8-row body): plain JAX, < 1024 elements.
    # This avoids any full-array pad/copy in front of a bandwidth-bound kernel.
    tail_sum = jnp.float32(0.0)
    if kernel_n < total_n:
        pt = p_flat[kernel_n:].astype(jnp.float32)
        tt = t_flat[kernel_n:].astype(jnp.float32)
        tail_sum = jnp.sum(jnp.abs((tt - pt) / (tt + jnp.float32(1e-8))))

    return (body_sum + tail_sum) / jnp.float32(total_n) * jnp.float32(100.0)


if __name__ == "__main__":
    key = jax.random.PRNGKey(0)
    k1, k2, k3, k4 = jax.random.split(key, 4)

    # Primary check: small regression-head-like output, 128-aligned element count.
    shape = (2, 4, 16, 16)
    y_pred = jax.random.normal(k1, shape, dtype=jnp.float32)
    # Keep y_true away from zero so the reference value is well conditioned.
    y_true = jax.random.uniform(k2, shape, dtype=jnp.float32,
                                minval=0.5, maxval=2.0)
    loss = jax.block_until_ready(mape_loss(y_pred, y_true))
    ref = jnp.mean(jnp.abs((y_true - y_pred) / (y_true + 1e-8))) * 100.0
    assert jnp.allclose(loss, ref, rtol=1e-5, atol=1e-4), (loss, ref)

    # Secondary check: element count not a multiple of 128 and not a block
    # multiple (exercises the masked last block, the parallel axis and the
    # plain-JAX tail path).
    shape2 = (2, 3, 17, 17)   # 1734 elements -> 13 rows (1 partial block) + tail
    y_pred2 = jax.random.normal(k3, shape2, dtype=jnp.float32)
    y_true2 = jax.random.uniform(k4, shape2, dtype=jnp.float32,
                                 minval=0.5, maxval=2.0)
    loss2 = jax.block_until_ready(mape_loss(y_pred2, y_true2, block_rows=8))
    ref2 = jnp.mean(jnp.abs((y_true2 - y_pred2) / (y_true2 + 1e-8))) * 100.0
    assert jnp.allclose(loss2, ref2, rtol=1e-5, atol=1e-4), (loss2, ref2)

    print("KERNEL_OK")
</pallas_src>

<mosaic_0001>
module attributes {stable_mosaic.version = 11 : i64} {
  func.func @_mape_partial_kernel(%arg0: i32, %arg1: i32, %arg2: memref<16x128xf32, #tpu.memory_space<vmem>>, %arg3: memref<16x128xf32, #tpu.memory_space<vmem>>, %arg4: memref<1x8x128xf32, #tpu.memory_space<vmem>>) attributes {dimension_semantics = [#tpu.dimension_semantics<parallel>, #tpu.dimension_semantics<arbitrary>], iteration_bounds = array<i64: 1, 1>, scalar_prefetch = 0 : i64, scratch_operands = 0 : i64, tpu.core_type = #tpu.core_type<tc>, window_params = [{transform_indices = @transform_0, window_bounds = array<i64: 16, 128>}, {transform_indices = @transform_1, window_bounds = array<i64: 16, 128>}, {transform_indices = @transform_2, window_bounds = array<i64: 1, 8, 128>}]} {
    %c0_i32 = arith.constant 0 : i32
    %0 = arith.cmpi eq, %arg1, %c0_i32 : i32
    %1 = arith.extui %0 : i1 to i32
    %c0_i32_0 = arith.constant 0 : i32
    %2 = arith.cmpi ne, %1, %c0_i32_0 : i32
    scf.if %2 {
      %cst = arith.constant 0.000000e+00 : f32
      %8 = vector.broadcast %cst : f32 to vector<1x8x128xf32>
      %c0 = arith.constant 0 : index
      %c0_3 = arith.constant 0 : index
      %c0_4 = arith.constant 0 : index
      %9 = vector.load %arg4[%c0, %c0_3, %c0_4] : memref<1x8x128xf32, #tpu.memory_space<vmem>>, vector<1x8x128xf32>
      tpu.vector_store %arg4[%c0, %c0_3, %c0_4], %8 {strides = array<i32>} : memref<1x8x128xf32, #tpu.memory_space<vmem>>, vector<1x8x128xf32>,
    } else {
    }
    %c1_i32 = arith.constant 1 : i32
    %3 = arith.muli %arg0, %c1_i32 : i32
    %4 = arith.addi %3, %arg1 : i32
    %c0_i32_1 = arith.constant 0 : i32
    %5 = arith.cmpi sle, %4, %c0_i32_1 : i32
    %6 = arith.extui %5 : i1 to i32
    %c0_i32_2 = arith.constant 0 : i32
    %7 = arith.cmpi ne, %6, %c0_i32_2 : i32
    scf.if %7 {
      %c0 = arith.constant 0 : index
      %c0_3 = arith.constant 0 : index
      %8 = vector.load %arg2[%c0, %c0_3] : memref<16x128xf32, #tpu.memory_space<vmem>>, vector<16x128xf32>
      %c0_4 = arith.constant 0 : index
      %c0_5 = arith.constant 0 : index
      %9 = vector.load %arg3[%c0_4, %c0_5] : memref<16x128xf32, #tpu.memory_space<vmem>>, vector<16x128xf32>
      %cst = arith.constant 9.99999993E-9 : f32
      %10 = vector.broadcast %cst : f32 to vector<16x128xf32>
      %11 = arith.addf %9, %10 : vector<16x128xf32>
      %12 = tpu.reciprocal %11 : vector<16x128xf32> -> vector<16x128xf32>
      %13 = arith.subf %9, %8 : vector<16x128xf32>
      %14 = arith.mulf %13, %12 : vector<16x128xf32>
      %15 = math.absf %14 : vector<16x128xf32>
      %16 = vector.shape_cast %15 : vector<16x128xf32> to vector<2x8x128xf32>
      %cst_6 = arith.constant dense<0.000000e+00> : vector<8x128xf32>
      %17 = vector.multi_reduction <add>, %16, %cst_6 [0] : vector<2x8x128xf32> to vector<8x128xf32>
      %c0_7 = arith.constant 0 : index
      %c0_8 = arith.constant 0 : index
      %c0_9 = arith.constant 0 : index
      %18 = vector.load %arg4[%c0_7, %c0_8, %c0_9] : memref<1x8x128xf32, #tpu.memory_space<vmem>>, vector<1x8x128xf32>
      %19 = vector.shape_cast %17 : vector<8x128xf32> to vector<1x8x128xf32>
      %20 = arith.addf %18, %19 : vector<1x8x128xf32>
      %c0_10 = arith.constant 0 : index
      %c0_11 = arith.constant 0 : index
      %c0_12 = arith.constant 0 : index
      %21 = vector.load %arg4[%c0_10, %c0_11, %c0_12] : memref<1x8x128xf32, #tpu.memory_space<vmem>>, vector<1x8x128xf32>
      tpu.vector_store %arg4[%c0_10, %c0_11, %c0_12], %20 {strides = array<i32>} : memref<1x8x128xf32, #tpu.memory_space<vmem>>, vector<1x8x128xf32>,
    } else {
    }
    return
  }
  func.func @transform_0(%arg0: i32, %arg1: i32) -> (i32, i32) {
    %c1_i32 = arith.constant 1 : i32
    %0 = arith.muli %arg0, %c1_i32 : i32
    %1 = arith.addi %0, %arg1 : i32
    %c0_i32 = arith.constant 0 : i32
    %2 = arith.minsi %1, %c0_i32 : i32
    %c0_i32_0 = arith.constant 0 : i32
    %c0_i32_1 = arith.constant 0 : i32
    return %2, %c0_i32_0 : i32, i32
  }
  func.func @transform_1(%arg0: i32, %arg1: i32) -> (i32, i32) {
    %c1_i32 = arith.constant 1 : i32
    %0 = arith.muli %arg0, %c1_i32 : i32
    %1 = arith.addi %0, %arg1 : i32
    %c0_i32 = arith.constant 0 : i32
    %2 = arith.minsi %1, %c0_i32 : i32
    %c0_i32_0 = arith.constant 0 : i32
    %c0_i32_1 = arith.constant 0 : i32
    return %2, %c0_i32_0 : i32, i32
  }
  func.func @transform_2(%arg0: i32, %arg1: i32) -> (i32, i32, i32) {
    %c0_i32 = arith.constant 0 : i32
    %c0_i32_0 = arith.constant 0 : i32
    %c0_i32_1 = arith.constant 0 : i32
    return %arg0, %c0_i32, %c0_i32_0 : i32, i32, i32
  }
}

</mosaic_0001>

<llo_original>
// kernel: tpu_custom_call.1
$region0: #{tpu_custom_call.1}
  #allocation0 [shape = 'u32[]', space=smem, size = 0x4, offset = 0x4, fixed_abs, tag = 'smem constant byte address 0x4 - core index']
  #allocation1 [shape = 'u32[144,128]{1,0:T(1,128)}', space=vmem, size = 0x12000, scoped, tag = 'internal scratch']
  %s0 = inlined_call_operand.hbm [shape: f32[16,128], index: 0, kind: input, shape index: {}]
  %s1 = inlined_call_operand.hbm [shape: f32[16,128], index: 1, kind: input, shape index: {}]
  %s2 = inlined_call_operand.hbm [shape: f32[1,8,128], index: 2, kind: output, shape index: {}]
  %s3 = sld [smem:[#allocation0]]
  $region34: #{tpu_custom_call.1} parent=0
    _
  %s5 = ssub.s32 1, %s3
  %s6 = scalar_select 0, %s5, %s3
  $region1: #{tpu_custom_call.1} parent=0
    #allocation2 [shape = 'u8[8192]{0}', space=vmem, size = 0x2000, scoped, tag = 'input window, operand 0, single buffered']
    #allocation3 [shape = 's32[1]{0}', space=sflag, size = 0x4, scoped, tag = 'scoped memory for tpu_custom_call.1']
    #allocation4 [shape = 's32[1]{0}', space=sflag, size = 0x4, scoped, tag = 'scoped memory for tpu_custom_call.1']
    #allocation5 [shape = 'u8[8192]{0}', space=vmem, size = 0x2000, scoped, tag = 'input window, operand 1, single buffered']
    #allocation6 [shape = 's32[1]{0}', space=sflag, size = 0x4, scoped, tag = 'scoped memory for tpu_custom_call.1']
    #allocation7 [shape = 'u8[4096]{0}', space=vmem, size = 0x1000, scoped, tag = 'output window, operand 0, single buffered']
    %7 = vsyncpa [#allocation3], 0
    %8 = vsyncpa [#allocation6], 0
    %9 = vsyncpa [#allocation4], 0
    // Predicated region
    $region2: #{tpu_custom_call.1} parent=1 // pred_check
      _
    $region3: #{tpu_custom_call.1} parent=1 // pred_check_branch
      %11 = sbr.rel (0) target = $region5
    $region4: #{tpu_custom_call.1} parent=1 // pred_region
      %s12 = sadd.s32 0, 0
      %p13 = scmp.lt.s32.totalorder %s12, 0
      %s14 = scalar_select %p13, %s12, 0
      %s15 = smul.u32 2, %s14
      %s17 = ssub.s32 256, 256
      %18 = vsyncadd [#allocation3], %s17
      %s19 = smul.addr %s15, 128
      %s20 = scalar_lea.hbm %s0, %s19
      %s21 = sshll.u32 [#allocation2], 4
      %s22 = int_to_ptr.vmem [resolvable:$true] %s21
      %27 = dma.hbm_to_vmem [thread:$0]  %s20, 256, %s22, [#allocation3], 128, 128, 8
    $region5: #{tpu_custom_call.1} parent=1 // pred_fallthru
      _
    // Predicated region
    $region6: #{tpu_custom_call.1} parent=1 // pred_check
      _
    $region7: #{tpu_custom_call.1} parent=1 // pred_check_branch
      %29 = sbr.rel (0) target = $region9
    $region8: #{tpu_custom_call.1} parent=1 // pred_region
      %s30 = sadd.s32 0, 0
      %p31 = scmp.lt.s32.totalorder %s30, 0
      %s32 = scalar_select %p31, %s30, 0
      %s33 = smul.u32 2, %s32
      %s35 = ssub.s32 256, 256
      %36 = vsyncadd [#allocation6], %s35
      %s37 = smul.addr %s33, 128
      %s38 = scalar_lea.hbm %s1, %s37
      %s39 = sshll.u32 [#allocation5], 4
      %s40 = int_to_ptr.vmem [resolvable:$true] %s39
      %45 = dma.hbm_to_vmem [thread:$0]  %s38, 256, %s40, [#allocation6], 128, 128, 8
    $region9: #{tpu_custom_call.1} parent=1 // pred_fallthru
      _
    // Predicated region
    $region10: #{tpu_custom_call.1} parent=1 // pred_check
      _
    $region11: #{tpu_custom_call.1} parent=1 // pred_check_branch
      %47 = sbr.rel (0) target = $region13
    $region12: #{tpu_custom_call.1} parent=1 // pred_region
      %48 = dma.done [#allocation3], 256
    $region13: #{tpu_custom_call.1} parent=1 // pred_fallthru
      _
    // Predicated region
    $region14: #{tpu_custom_call.1} parent=1 // pred_check
      _
    $region15: #{tpu_custom_call.1} parent=1 // pred_check_branch
      %50 = sbr.rel (0) target = $region17
    $region16: #{tpu_custom_call.1} parent=1 // pred_region
      %51 = dma.done [#allocation6], 256
    $region17: #{tpu_custom_call.1} parent=1 // pred_fallthru
      _
    %s52 = sadd.s32 0, 0
    %p53 = scmp.lt.s32.totalorder %s52, 0
    %s54 = scalar_select %p53, %s52, 0
    %s55 = smul.u32 2, %s54
    %s56 = sadd.s32 0, 0
    %p57 = scmp.lt.s32.totalorder %s56, 0
    %s58 = scalar_select %p57, %s56, 0
    %s59 = smul.u32 2, %s58
    %p60 = scmp.eq.s32.totalorder 0, 0
    // Predicated region
    $region18: #{tpu_custom_call.1} parent=1 // pred_check
      %p61 = pneg %p60
    $region19: #{tpu_custom_call.1} parent=1 // pred_check_branch
      %63 = sbr.rel (%p61) target = $region21
    $region20: #{tpu_custom_call.1} parent=1 // pred_region
      %64 = vst [vmem:[#allocation7] sm:$0xff] 0.0
    $region21: #{tpu_custom_call.1} parent=1 // pred_fallthru
      _
    %s65 = sadd.s32 0, 0
    %p66 = scmp.le.s32.totalorder %s65, 0
    // Predicated region
    $region22: #{tpu_custom_call.1} parent=1 // pred_check
      %p67 = pneg %p66
    $region23: #{tpu_custom_call.1} parent=1 // pred_check_branch
      %69 = sbr.rel (%p67) target = $region25
    $region24: #{tpu_custom_call.1} parent=1 // pred_region
      %v70 = vld [vmem:[#allocation2] sm:$0xff]
      %v71 = vld [vmem:[#allocation2 + $0x8] sm:$0xff]
      %v72 = vld [vmem:[#allocation5] sm:$0xff]
      %v73 = vld [vmem:[#allocation5 + $0x8] sm:$0xff]
      %v74 = vadd.f32 %v72, 1e-08
      %v75 = vadd.f32 %v73, 1e-08
      %v76 = vrcp.pop %v74
      %v77 = vrcp.pop %v75
      %v78 = vsub.f32 %v72, %v70
      %v79 = vsub.f32 %v73, %v71
      %v80 = vmul.f32 %v78, %v76
      %v81 = vmul.f32 %v79, %v77
      %v82 = vand.u32 2147483647, %v80
      %v83 = vand.u32 2147483647, %v81
      %v84 = vadd.f32 %v82, %v83
      %v85 = vld [vmem:[#allocation7] sm:$0xff]
      %v86 = vadd.f32 %v85, %v84
      %87 = vst [vmem:[#allocation7] sm:$0xff] %v86
    $region25: #{tpu_custom_call.1} parent=1 // pred_fallthru
      _
    // Predicated region
    $region26: #{tpu_custom_call.1} parent=1 // pred_check
      _
    $region27: #{tpu_custom_call.1} parent=1 // pred_check_branch
      %89 = sbr.rel (0) target = $region29
    $region28: #{tpu_custom_call.1} parent=1 // pred_region
      %s91 = ssub.s32 128, 128
      %92 = vsyncadd [#allocation4], %s91
      %s94 = sshll.u32 [#allocation7], 4
      %s95 = int_to_ptr.vmem [resolvable:$true] %s94
      %97 = dma.vmem_to_hbm [thread:$0]  %s95, 128, %s2, [#allocation4]
    $region29: #{tpu_custom_call.1} parent=1 // pred_fallthru
      _
    // Predicated region
    $region30: #{tpu_custom_call.1} parent=1 // pred_check
      _
    $region31: #{tpu_custom_call.1} parent=1 // pred_check_branch
      %99 = sbr.rel (0) target = $region33
    $region32: #{tpu_custom_call.1} parent=1 // pred_region
      %100 = dma.done [#allocation4], 128
    $region33: #{tpu_custom_call.1} parent=1 // pred_fallthru
      _
    %101 = vsyncpa [#allocation3], 1
    %102 = vsyncpa [#allocation6], 1
    %103 = vsyncpa [#allocation4], 1

</llo_original>
